<compile_context>
chip_gen: v7x
topology: tpu7x:2x2x1
jax: 0.10.0
libtpu: 0.0.40
codegen_flags: <defaults>
</compile_context>

<pallas_src>
import functools

import jax
import jax.numpy as jnp
from jax import lax
from jax.experimental import pallas as pl
from jax.experimental.pallas import tpu as pltpu

_LANES = 128


# --------------------------------------------------------------------------- #
# Parameter prep (hoist out of the per-call path)
# --------------------------------------------------------------------------- #
def se_prepare_params(w1, b1, w2, b2):
    """w1: (D//8, D, 1), b1: (D//8,), w2: (D, D//8, 1), b2: (D,) -> prepped f32."""
    w1t = jnp.transpose(w1[:, :, 0]).astype(jnp.float32)   # (D, D//8)
    w2t = jnp.transpose(w2[:, :, 0]).astype(jnp.float32)   # (D//8, D)
    b1f = b1.astype(jnp.float32).reshape(1, -1)             # (1, D//8)
    b2f = b2.astype(jnp.float32).reshape(1, -1)             # (1, D)
    return w1t, b1f, w2t, b2f


# --------------------------------------------------------------------------- #
# Fused single-pass kernel (x read once, written once)
# --------------------------------------------------------------------------- #
def _se_fused_kernel(x_ref, w1t_ref, b1_ref, w2t_ref, b2_ref, o_ref, *, inv_t):
    x = x_ref[...]                                                    # (1, D, T)
    m = jnp.sum(x.astype(jnp.float32), axis=2) * inv_t                # (1, D)
    h = jnp.maximum(
        jnp.dot(m, w1t_ref[...], preferred_element_type=jnp.float32) + b1_ref[...],
        0.0)                                                          # (1, D//8)
    g = jax.nn.sigmoid(
        jnp.dot(h, w2t_ref[...], preferred_element_type=jnp.float32) + b2_ref[...])
    o_ref[...] = x * g[:, :, None].astype(x.dtype)                    # gate over T


# --------------------------------------------------------------------------- #
# Two-pass path: pass 1 (squeeze / mean), pass 2 (gate multiply)
# --------------------------------------------------------------------------- #
def _se_sum_kernel(x_ref, mean_ref, acc_ref, *, inv_t, tile_t, rem):
    """Accumulate per-(batch, channel) sums over T tiles into a (1, D, 128) f32
    accumulator with pure VPU adds; cross-lane reduce + mean only at the last tile."""
    n_chunks = tile_t // _LANES
    t = pl.program_id(1)
    last = pl.num_programs(1) - 1

    @pl.when(t == 0)
    def _():
        acc_ref[...] = jnp.zeros_like(acc_ref)

    def add_chunks(limit, mask_partial):
        for k in range(limit):
            chunk = x_ref[:, :, k * _LANES:(k + 1) * _LANES].astype(jnp.float32)
            if mask_partial and (k + 1) * _LANES > rem:
                lane = lax.broadcasted_iota(jnp.int32, chunk.shape, 2)
                chunk = jnp.where(lane < (rem - k * _LANES), chunk, 0.0)
            acc_ref[...] += chunk

    if rem == 0:
        add_chunks(n_chunks, False)
    else:
        @pl.when(t != last)
        def _():
            add_chunks(n_chunks, False)

        @pl.when(t == last)
        def _():
            add_chunks((rem + _LANES - 1) // _LANES, True)

    @pl.when(t == last)
    def _():
        mean_ref[...] = jnp.sum(acc_ref[...], axis=2, keepdims=True) * inv_t


def _se_gate_kernel(x_ref, g_ref, o_ref):
    """out = residual * gate, in the native input dtype (gate broadcast over lanes)."""
    o_ref[...] = x_ref[...] * g_ref[...]


# --------------------------------------------------------------------------- #
# Wrapper
# --------------------------------------------------------------------------- #
def se_forward_prepared(x, params, *, fused_slab_bytes=4 << 20, max_tile_t=2048,
                        max_block_bytes=4 << 20, donate_input=False):
    """x: (B, D, T); params = se_prepare_params(w1, b1, w2, b2)."""
    w1t, b1f, w2t, b2f = params
    B, D, T = x.shape
    d8 = w1t.shape[1]
    elem = x.dtype.itemsize
    slab_bytes = D * T * elem
    alias = {0: 0} if donate_input else {}

    # ---------------- Fused single-pass path (one HBM read of x) -------------
    if slab_bytes <= fused_slab_bytes:
        vmem_limit = int(min(64 << 20, max(32 << 20, 5 * slab_bytes)))
        return pl.pallas_call(
            functools.partial(_se_fused_kernel, inv_t=1.0 / T),
            out_shape=jax.ShapeDtypeStruct((B, D, T), x.dtype),
            grid_spec=pltpu.PrefetchScalarGridSpec(
                num_scalar_prefetch=0,
                grid=(B,),
                in_specs=[
                    pl.BlockSpec((1, D, T), lambda b: (b, 0, 0)),   # per-batch slab
                    pl.BlockSpec((D, d8), lambda b: (0, 0)),
                    pl.BlockSpec((1, d8), lambda b: (0, 0)),
                    pl.BlockSpec((d8, D), lambda b: (0, 0)),
                    pl.BlockSpec((1, D), lambda b: (0, 0)),
                ],
                out_specs=pl.BlockSpec((1, D, T), lambda b: (b, 0, 0)),
            ),
            compiler_params=pltpu.CompilerParams(
                dimension_semantics=("parallel",),
                vmem_limit_bytes=vmem_limit),
            cost_estimate=pl.CostEstimate(
                flops=2 * B * D * T + 4 * B * D * d8,
                transcendentals=B * D,
                bytes_accessed=2 * B * D * T * elem + 8 * D * d8 + 4 * (D + d8)),
            input_output_aliases=alias,
        )(x, w1t, b1f, w2t, b2f)

    # ---------------- Two-pass tiled path ------------------------------------
    # Lane-dense seq tile: multiple of 128, capped by the block-byte budget and
    # by the (128-rounded) sequence length; floor of 128 lanes (HW minimum).
    lanes_budget = (max_block_bytes // (D * elem)) // _LANES * _LANES
    tT = min(max_tile_t, max(lanes_budget, 0), ((T + _LANES - 1) // _LANES) * _LANES)
    tT = max(_LANES, tT)
    nT = (T + tT - 1) // tT
    rem = T % tT
    block_bytes = tT * D * elem
    # Pass-2 working set ~ 2*(in) + 2*(out) blocks + gate; pass-1 ~ 2*(in) + acc.
    vmem_limit = int(min(64 << 20, max(32 << 20, 6 * block_bytes)))

    # ---- Pass 1: squeeze (mean over the sequence axis), T-tiled reduction ----
    mean = pl.pallas_call(
        functools.partial(_se_sum_kernel, inv_t=1.0 / T, tile_t=tT, rem=rem),
        out_shape=jax.ShapeDtypeStruct((B, D, 1), jnp.float32),
        grid_spec=pltpu.PrefetchScalarGridSpec(
            num_scalar_prefetch=0,
            grid=(B, nT),
            in_specs=[pl.BlockSpec((1, D, tT), lambda b, t: (b, 0, t))],
            out_specs=pl.BlockSpec((1, D, 1), lambda b, t: (b, 0, 0)),
            scratch_shapes=[pltpu.VMEM((1, D, _LANES), jnp.float32)],
        ),
        compiler_params=pltpu.CompilerParams(
            dimension_semantics=("parallel", "arbitrary"),
            vmem_limit_bytes=vmem_limit),
        cost_estimate=pl.CostEstimate(
            flops=B * D * T,
            transcendentals=0,
            bytes_accessed=B * D * T * elem + B * D * 4),
    )(x)

    # ---- Excitation: tiny (B, D) FC -> ReLU -> FC -> sigmoid, in plain XLA ---
    m = mean[:, :, 0]                                         # (B, D) f32
    h = jnp.maximum(m @ w1t + b1f, 0.0)                       # (B, D//8)
    g = jax.nn.sigmoid(h @ w2t + b2f)                         # (B, D)
    g = g.astype(x.dtype).reshape(B, D, 1)                    # gate in native dtype

    # ---- Pass 2: gate the residual (bandwidth-bound elementwise multiply) ----
    out = pl.pallas_call(
        _se_gate_kernel,
        out_shape=jax.ShapeDtypeStruct((B, D, T), x.dtype),
        grid_spec=pltpu.PrefetchScalarGridSpec(
            num_scalar_prefetch=0,
            grid=(B, nT),
            in_specs=[
                pl.BlockSpec((1, D, tT), lambda b, t: (b, 0, t)),   # residual tile
                pl.BlockSpec((1, D, 1), lambda b, t: (b, 0, 0)),    # per-batch gate
            ],
            out_specs=pl.BlockSpec((1, D, tT), lambda b, t: (b, 0, t)),
        ),
        compiler_params=pltpu.CompilerParams(
            dimension_semantics=("parallel", "parallel"),
            vmem_limit_bytes=vmem_limit),
        cost_estimate=pl.CostEstimate(
            flops=B * D * T,
            transcendentals=0,
            bytes_accessed=2 * B * D * T * elem + B * D * elem),
        input_output_aliases=alias,
    )(x, g)

    return out


def se_forward(x, w1, b1, w2, b2, **kwargs):
    """Convenience entry taking raw Conv1d parameters (prep done per call; prefer
    se_prepare_params + se_forward_prepared to hoist the weight prep)."""
    return se_forward_prepared(x, se_prepare_params(w1, b1, w2, b2), **kwargs)


def se_reference(x, w1, b1, w2, b2):
    """Pure-JAX reference mirroring the PyTorch forward."""
    m = jnp.mean(x, axis=2)                                   # (B, D)
    h = jnp.maximum(m @ w1[:, :, 0].T + b1, 0.0)              # (B, D//8)
    g = jax.nn.sigmoid(h @ w2[:, :, 0].T + b2)                # (B, D)
    return x * g[:, :, None]


if __name__ == "__main__":
    B, D = 2, 32          # dim must be divisible by 8
    d8 = D // 8

    key = jax.random.PRNGKey(0)
    kx1, kx2, k1, k2, k3, k4 = jax.random.split(key, 6)

    # Synthetic Conv1d params (shapes match nn.Conv1d(D, D//8, 1), nn.Conv1d(D//8, D, 1)).
    w1 = jax.random.normal(k1, (d8, D, 1), dtype=jnp.float32) * (1.0 / jnp.sqrt(D))
    b1 = jax.random.normal(k2, (d8,), dtype=jnp.float32) * 0.1
    w2 = jax.random.normal(k3, (D, d8, 1), dtype=jnp.float32) * (1.0 / jnp.sqrt(d8))
    b2 = jax.random.normal(k4, (D,), dtype=jnp.float32) * 0.1
    params = se_prepare_params(w1, b1, w2, b2)

    # Case 1: small sequence -> fused single-pass kernel (x read once).
    T1 = 16
    x1 = jax.random.normal(kx1, (B, D, T1), dtype=jnp.float32)
    out1 = jax.block_until_ready(se_forward_prepared(x1, params))
    assert out1.shape == (B, D, T1)
    assert jnp.allclose(out1, se_reference(x1, w1, b1, w2, b2),
                        atol=1e-5, rtol=1e-5), "fused path mismatch vs reference"

    # Case 2: non-tile-aligned T, force the two-pass tiled path (masked last tile,
    # no pad / slice round-trips).
    T2 = 200
    x2 = jax.random.normal(kx2, (B, D, T2), dtype=jnp.float32)
    out2 = jax.block_until_ready(
        se_forward_prepared(x2, params, fused_slab_bytes=0))
    assert out2.shape == (B, D, T2)
    assert jnp.allclose(out2, se_reference(x2, w1, b1, w2, b2),
                        atol=1e-5, rtol=1e-5), "two-pass path mismatch vs reference"

    print("KERNEL_OK")
</pallas_src>

<mosaic_0001>
module attributes {stable_mosaic.version = 11 : i64} {
  func.func @_se_fused_kernel(%arg0: i32, %arg1: memref<1x32x16xf32, #tpu.memory_space<vmem>>, %arg2: memref<32x4xf32, #tpu.memory_space<vmem>>, %arg3: memref<1x4xf32, #tpu.memory_space<vmem>>, %arg4: memref<4x32xf32, #tpu.memory_space<vmem>>, %arg5: memref<1x32xf32, #tpu.memory_space<vmem>>, %arg6: memref<1x32x16xf32, #tpu.memory_space<vmem>>) attributes {dimension_semantics = [#tpu.dimension_semantics<parallel>], iteration_bounds = array<i64: 2>, scalar_prefetch = 0 : i64, scratch_operands = 0 : i64, tpu.core_type = #tpu.core_type<tc>, window_params = [{transform_indices = @transform_0, window_bounds = array<i64: 1, 32, 16>}, {pipeline_mode = #tpu.pipeline_mode<synchronous>, transform_indices = @transform_1, window_bounds = array<i64: 32, 4>}, {pipeline_mode = #tpu.pipeline_mode<synchronous>, transform_indices = @transform_2, window_bounds = array<i64: 1, 4>}, {pipeline_mode = #tpu.pipeline_mode<synchronous>, transform_indices = @transform_3, window_bounds = array<i64: 4, 32>}, {pipeline_mode = #tpu.pipeline_mode<synchronous>, transform_indices = @transform_4, window_bounds = array<i64: 1, 32>}, {transform_indices = @transform_5, window_bounds = array<i64: 1, 32, 16>}]} {
    %c0 = arith.constant 0 : index
    %c0_0 = arith.constant 0 : index
    %c0_1 = arith.constant 0 : index
    %0 = vector.load %arg1[%c0, %c0_0, %c0_1] : memref<1x32x16xf32, #tpu.memory_space<vmem>>, vector<1x32x16xf32>
    %cst = arith.constant dense<0.000000e+00> : vector<1x32xf32>
    %1 = vector.multi_reduction <add>, %0, %cst [2] : vector<1x32x16xf32> to vector<1x32xf32>
    %cst_2 = arith.constant 6.250000e-02 : f32
    %2 = vector.broadcast %cst_2 : f32 to vector<1x32xf32>
    %3 = arith.mulf %1, %2 : vector<1x32xf32>
    %c0_3 = arith.constant 0 : index
    %c0_4 = arith.constant 0 : index
    %4 = vector.load %arg2[%c0_3, %c0_4] : memref<32x4xf32, #tpu.memory_space<vmem>>, vector<32x4xf32>
    %cst_5 = arith.constant dense<0.000000e+00> : vector<1x4xf32>
    %5 = tpu.matmul %3, %4, %cst_5 {dimension_numbers = #tpu.dot_dimension_numbers<[1], [0], [0], [1], [0, 0, 1, 1], [], []>} : vector<1x32xf32>, vector<32x4xf32>, vector<1x4xf32> -> vector<1x4xf32>
    %c0_6 = arith.constant 0 : index
    %c0_7 = arith.constant 0 : index
    %6 = vector.load %arg3[%c0_6, %c0_7] : memref<1x4xf32, #tpu.memory_space<vmem>>, vector<1x4xf32>
    %7 = arith.addf %5, %6 : vector<1x4xf32>
    %cst_8 = arith.constant 0.000000e+00 : f32
    %8 = vector.broadcast %cst_8 : f32 to vector<1x4xf32>
    %9 = arith.maximumf %7, %8 : vector<1x4xf32>
    %c0_9 = arith.constant 0 : index
    %c0_10 = arith.constant 0 : index
    %10 = vector.load %arg4[%c0_9, %c0_10] : memref<4x32xf32, #tpu.memory_space<vmem>>, vector<4x32xf32>
    %cst_11 = arith.constant dense<0.000000e+00> : vector<1x32xf32>
    %11 = tpu.matmul %9, %10, %cst_11 {dimension_numbers = #tpu.dot_dimension_numbers<[1], [0], [0], [1], [0, 0, 1, 1], [], []>} : vector<1x4xf32>, vector<4x32xf32>, vector<1x32xf32> -> vector<1x32xf32>
    %c0_12 = arith.constant 0 : index
    %c0_13 = arith.constant 0 : index
    %12 = vector.load %arg5[%c0_12, %c0_13] : memref<1x32xf32, #tpu.memory_space<vmem>>, vector<1x32xf32>
    %13 = arith.addf %11, %12 : vector<1x32xf32>
    %14 = arith.negf %13 : vector<1x32xf32>
    %15 = math.exp %14 : vector<1x32xf32>
    %cst_14 = arith.constant 1.000000e+00 : f32
    %16 = vector.broadcast %cst_14 : f32 to vector<1x32xf32>
    %17 = arith.addf %16, %15 : vector<1x32xf32>
    %18 = arith.divf %16, %17 : vector<1x32xf32>
    %19 = vector.shape_cast %18 : vector<1x32xf32> to vector<1x32x1xf32>
    %20 = vector.broadcast %19 : vector<1x32x1xf32> to vector<1x32x16xf32>
    %21 = arith.mulf %0, %20 : vector<1x32x16xf32>
    %c0_15 = arith.constant 0 : index
    %c0_16 = arith.constant 0 : index
    %c0_17 = arith.constant 0 : index
    %22 = vector.load %arg6[%c0_15, %c0_16, %c0_17] : memref<1x32x16xf32, #tpu.memory_space<vmem>>, vector<1x32x16xf32>
    tpu.vector_store %arg6[%c0_15, %c0_16, %c0_17], %21 {strides = array<i32>} : memref<1x32x16xf32, #tpu.memory_space<vmem>>, vector<1x32x16xf32>,
    return
  }
  func.func @transform_0(%arg0: i32) -> (i32, i32, i32) {
    %c0_i32 = arith.constant 0 : i32
    %c0_i32_0 = arith.constant 0 : i32
    %c0_i32_1 = arith.constant 0 : i32
    return %arg0, %c0_i32, %c0_i32_0 : i32, i32, i32
  }
  func.func @transform_1(%arg0: i32) -> (i32, i32) {
    %c0_i32 = arith.constant 0 : i32
    %c0_i32_0 = arith.constant 0 : i32
    %c0_i32_1 = arith.constant 0 : i32
    return %c0_i32, %c0_i32_0 : i32, i32
  }
  func.func @transform_2(%arg0: i32) -> (i32, i32) {
    %c0_i32 = arith.constant 0 : i32
    %c0_i32_0 = arith.constant 0 : i32
    %c0_i32_1 = arith.constant 0 : i32
    return %c0_i32, %c0_i32_0 : i32, i32
  }
  func.func @transform_3(%arg0: i32) -> (i32, i32) {
    %c0_i32 = arith.constant 0 : i32
    %c0_i32_0 = arith.constant 0 : i32
    %c0_i32_1 = arith.constant 0 : i32
    return %c0_i32, %c0_i32_0 : i32, i32
  }
  func.func @transform_4(%arg0: i32) -> (i32, i32) {
    %c0_i32 = arith.constant 0 : i32
    %c0_i32_0 = arith.constant 0 : i32
    %c0_i32_1 = arith.constant 0 : i32
    return %c0_i32, %c0_i32_0 : i32, i32
  }
  func.func @transform_5(%arg0: i32) -> (i32, i32, i32) {
    %c0_i32 = arith.constant 0 : i32
    %c0_i32_0 = arith.constant 0 : i32
    %c0_i32_1 = arith.constant 0 : i32
    return %arg0, %c0_i32, %c0_i32_0 : i32, i32, i32
  }
}

</mosaic_0001>

<llo_original>
// kernel: tpu_custom_call.1
$region0: #{tpu_custom_call.1}
  #allocation0 [shape = 'u32[]', space=smem, size = 0x4, offset = 0x4, fixed_abs, tag = 'smem constant byte address 0x4 - core index']
  #allocation1 [shape = 'u32[144,128]{1,0:T(1,128)}', space=vmem, size = 0x12000, scoped, tag = 'internal scratch']
  %s0 = inlined_call_operand.vmem [shape: f32[2,32,16], index: 0, kind: input, shape index: {}]
  %s1 = inlined_call_operand.vmem [shape: f32[32,4], index: 1, kind: input, shape index: {}]
  %s2 = inlined_call_operand.vmem [shape: f32[1,4], index: 2, kind: input, shape index: {}]
  %s3 = inlined_call_operand.vmem [shape: f32[4,32], index: 3, kind: input, shape index: {}]
  %s4 = inlined_call_operand.vmem [shape: f32[1,32], index: 4, kind: input, shape index: {}]
  %s5 = inlined_call_operand.vmem [shape: f32[2,32,16], index: 5, kind: output, shape index: {}]
  %s6 = sld [smem:[#allocation0]]
  $region53: #{tpu_custom_call.1} parent=0
    _
  %s8 = ssub.s32 1, %s6
  %s9 = scalar_select 0, %s8, %s6
  loop: start=0, step=1, limit=4
  $region2: #{tpu_custom_call.1} parent=0 // loop_pre_header
    _
  $region3: #{tpu_custom_call.1} parent=0 // loop_header
    %s11 = sphi 0, %s15
    %p12 = scmp.ge.s32.totalorder %s11, 4
    %s21 = sphi 0, %s23
    %s24 = sphi 0, %s21
    %s25 = sphi 0, %s24
    %s41 = sphi 0, %s25
    %s45 = sphi 0, %s45
    %s47 = sphi 0, %s45
    %s48 = sphi 0, %s47
    %s62 = sphi 0, %s48
    %s66 = sphi 0, %s66
    %s68 = sphi 0, %s66
    %s69 = sphi 0, %s68
    %s83 = sphi 0, %s69
    %s87 = sphi 0, %s87
    %s89 = sphi 0, %s87
    %s90 = sphi 0, %s89
    %s104 = sphi 0, %s90
    %s108 = sphi 0, %s108
    %s110 = sphi 0, %s108
    %s111 = sphi 0, %s110
    %s125 = sphi 0, %s111
    %s131 = sphi 0, %s133
    %s134 = sphi 0, %s131
    %s135 = sphi 0, %s134
    %s151 = sphi 0, %s135
  $region4: #{tpu_custom_call.1} parent=0 // loop_header_branch
    %14 = sbr.rel (%p12) target = $region8
  $region5: #{tpu_custom_call.1} parent=0 // loop_body
    %s16 = ssub.s32 %s11, 1
    %s17 = ssub.s32 %s11, 2
    %s18 = sadd.s32 %s11, 1
    %s19 = ssub.s32 %s11, %s18
    %p20 = scmp.eq.s32.totalorder %s19, 0
    %s22 = sadd.s32 %s21, 1
    %s23 = scalar_select %p20, %s21, %s22
    %p26 = pneg %p20
    %p27 = scmp.eq.s32.totalorder %s11, 1
    %p28 = por %p26, %p27
    %p29 = scmp.ne.s32.totalorder %s21, %s24
    %p30 = scmp.eq.s32.totalorder %s11, 0
    %p31 = por %p29, %p30
    %p32 = scmp.ne.s32.totalorder %s21, %s24
    %p33 = scmp.eq.s32.totalorder %s16, 1
    %p34 = por %p32, %p33
    %p35 = scmp.ne.s32.totalorder %s24, %s25
    %p36 = scmp.eq.s32.totalorder %s16, 0
    %p37 = por %p35, %p36
    %p38 = scmp.ne.s32.totalorder %s24, %s25
    %p39 = scmp.eq.s32.totalorder %s17, 1
    %p40 = por %p38, %p39
    %p42 = scmp.ne.s32.totalorder %s25, %s41
    %p43 = scmp.eq.s32.totalorder %s17, 0
    %p44 = por %p42, %p43
    %s46 = sadd.s32 %s45, 1
    %p49 = scmp.eq.s32.totalorder %s11, 1
    %p50 = scmp.ne.s32.totalorder %s45, %s47
    %p51 = scmp.eq.s32.totalorder %s11, 0
    %p52 = por %p50, %p51
    %p53 = scmp.ne.s32.totalorder %s45, %s47
    %p54 = scmp.eq.s32.totalorder %s16, 1
    %p55 = por %p53, %p54
    %p56 = scmp.ne.s32.totalorder %s47, %s48
    %p57 = scmp.eq.s32.totalorder %s16, 0
    %p58 = por %p56, %p57
    %p59 = scmp.ne.s32.totalorder %s47, %s48
    %p60 = scmp.eq.s32.totalorder %s17, 1
    %p61 = por %p59, %p60
    %p63 = scmp.ne.s32.totalorder %s48, %s62
    %p64 = scmp.eq.s32.totalorder %s17, 0
    %p65 = por %p63, %p64
    %s67 = sadd.s32 %s66, 1
    %p70 = scmp.eq.s32.totalorder %s11, 1
    %p71 = scmp.ne.s32.totalorder %s66, %s68
    %p72 = scmp.eq.s32.totalorder %s11, 0
    %p73 = por %p71, %p72
    %p74 = scmp.ne.s32.totalorder %s66, %s68
    %p75 = scmp.eq.s32.totalorder %s16, 1
    %p76 = por %p74, %p75
    %p77 = scmp.ne.s32.totalorder %s68, %s69
    %p78 = scmp.eq.s32.totalorder %s16, 0
    %p79 = por %p77, %p78
    %p80 = scmp.ne.s32.totalorder %s68, %s69
    %p81 = scmp.eq.s32.totalorder %s17, 1
    %p82 = por %p80, %p81
    %p84 = scmp.ne.s32.totalorder %s69, %s83
    %p85 = scmp.eq.s32.totalorder %s17, 0
    %p86 = por %p84, %p85
    %s88 = sadd.s32 %s87, 1
    %p91 = scmp.eq.s32.totalorder %s11, 1
    %p92 = scmp.ne.s32.totalorder %s87, %s89
    %p93 = scmp.eq.s32.totalorder %s11, 0
    %p94 = por %p92, %p93
    %p95 = scmp.ne.s32.totalorder %s87, %s89
    %p96 = scmp.eq.s32.totalorder %s16, 1
    %p97 = por %p95, %p96
    %p98 = scmp.ne.s32.totalorder %s89, %s90
    %p99 = scmp.eq.s32.totalorder %s16, 0
    %p100 = por %p98, %p99
    %p101 = scmp.ne.s32.totalorder %s89, %s90
    %p102 = scmp.eq.s32.totalorder %s17, 1
    %p103 = por %p101, %p102
    %p105 = scmp.ne.s32.totalorder %s90, %s104
    %p106 = scmp.eq.s32.totalorder %s17, 0
    %p107 = por %p105, %p106
    %s109 = sadd.s32 %s108, 1
    %p112 = scmp.eq.s32.totalorder %s11, 1
    %p113 = scmp.ne.s32.totalorder %s108, %s110
    %p114 = scmp.eq.s32.totalorder %s11, 0
    %p115 = por %p113, %p114
    %p116 = scmp.ne.s32.totalorder %s108, %s110
    %p117 = scmp.eq.s32.totalorder %s16, 1
    %p118 = por %p116, %p117
    %p119 = scmp.ne.s32.totalorder %s110, %s111
    %p120 = scmp.eq.s32.totalorder %s16, 0
    %p121 = por %p119, %p120
    %p122 = scmp.ne.s32.totalorder %s110, %s111
    %p123 = scmp.eq.s32.totalorder %s17, 1
    %p124 = por %p122, %p123
    %p126 = scmp.ne.s32.totalorder %s111, %s125
    %p127 = scmp.eq.s32.totalorder %s17, 0
    %p128 = por %p126, %p127
    %s129 = ssub.s32 %s11, %s18
    %p130 = scmp.eq.s32.totalorder %s129, 0
    %s132 = sadd.s32 %s131, 1
    %s133 = scalar_select %p130, %s131, %s132
    %p136 = pneg %p130
    %p137 = scmp.eq.s32.totalorder %s11, 1
    %p138 = por %p136, %p137
    %p139 = scmp.ne.s32.totalorder %s131, %s134
    %p140 = scmp.eq.s32.totalorder %s11, 0
    %p141 = por %p139, %p140
    %p142 = scmp.ne.s32.totalorder %s131, %s134
    %p143 = scmp.eq.s32.totalorder %s16, 1
    %p144 = por %p142, %p143
    %p145 = scmp.ne.s32.totalorder %s134, %s135
    %p146 = scmp.eq.s32.totalorder %s16, 0
    %p147 = por %p145, %p146
    %p148 = scmp.ne.s32.totalorder %s134, %s135
    %p149 = scmp.eq.s32.totalorder %s17, 1
    %p150 = por %p148, %p149
    %p152 = scmp.ne.s32.totalorder %s135, %s151
    %p153 = scmp.eq.s32.totalorder %s17, 0
    %p154 = por %p152, %p153
    %p155 = scmp.le.s32.totalorder 1, %s11
    %p156 = scmp.lt.s32.totalorder %s11, 3
    %p157 = pnand %p155, %p156
    %p158 = pneg %p157
    // Predicated region
    $region9: #{tpu_custom_call.1} parent=5 // pred_check
      _
    $region10: #{tpu_custom_call.1} parent=5 // pred_check_branch
      %160 = sbr.rel (%p157) target = $region12
    $region11: #{tpu_custom_call.1} parent=5 // pred_region
      %s161 = ssub.s32 %s11, 1
      // Predicated region
      $region13: #{tpu_custom_call.1} parent=11 // pred_check
        %p162 = pneg %p58
      $region14: #{tpu_custom_call.1} parent=11 // pred_check_branch
        %164 = sbr.rel (%p162) target = $region16
      $region15: #{tpu_custom_call.1} parent=11 // pred_region
        _
      $region16: #{tpu_custom_call.1} parent=11 // pred_fallthru
        _
      // Predicated region
      $region17: #{tpu_custom_call.1} parent=11 // pred_check
        %p165 = pneg %p79
      $region18: #{tpu_custom_call.1} parent=11 // pred_check_branch
        %167 = sbr.rel (%p165) target = $region20
      $region19: #{tpu_custom_call.1} parent=11 // pred_region
        _
      $region20: #{tpu_custom_call.1} parent=11 // pred_fallthru
        _
      // Predicated region
      $region21: #{tpu_custom_call.1} parent=11 // pred_check
        %p168 = pneg %p100
      $region22: #{tpu_custom_call.1} parent=11 // pred_check_branch
        %170 = sbr.rel (%p168) target = $region24
      $region23: #{tpu_custom_call.1} parent=11 // pred_region
        _
      $region24: #{tpu_custom_call.1} parent=11 // pred_fallthru
        _
      // Predicated region
      $region25: #{tpu_custom_call.1} parent=11 // pred_check
        %p171 = pneg %p121
      $region26: #{tpu_custom_call.1} parent=11 // pred_check_branch
        %173 = sbr.rel (%p171) target = $region28
      $region27: #{tpu_custom_call.1} parent=11 // pred_region
        _
      $region28: #{tpu_custom_call.1} parent=11 // pred_fallthru
        _
    $region12: #{tpu_custom_call.1} parent=5 // pred_fallthru
      _
    %p174 = scmp.lt.s32.totalorder %s11, 2
    // Predicated region
    $region29: #{tpu_custom_call.1} parent=5 // pred_check
      %p175 = pneg %p174
    $region30: #{tpu_custom_call.1} parent=5 // pred_check_branch
      %177 = sbr.rel (%p175) target = $region32
    $region31: #{tpu_custom_call.1} parent=5 // pred_region
      // Predicated region
      $region33: #{tpu_custom_call.1} parent=31 // pred_check
        %p178 = pneg %p31
      $region34: #{tpu_custom_call.1} parent=31 // pred_check_branch
        %180 = sbr.rel (%p178) target = $region36
      $region35: #{tpu_custom_call.1} parent=31 // pred_region
        %p181 = scmp.lt.s32.totalorder %s11, 1
        %s182 = scalar_select %p181, %s11, 1
        %s183 = smul.addr %s182, 4
        %s184 = smul.addr %s183, 8
        %s185 = scalar_lea.vmem %s0, %s184
      $region36: #{tpu_custom_call.1} parent=31 // pred_fallthru
        _
    $region32: #{tpu_custom_call.1} parent=5 // pred_fallthru
      _
    %p186 = scmp.le.s32.totalorder 1, %s11
    %p187 = scmp.lt.s32.totalorder %s11, 3
    %p188 = pnand %p186, %p187
    %p189 = pneg %p188
    // Predicated region
    $region37: #{tpu_custom_call.1} parent=5 // pred_check
      _
    $region38: #{tpu_custom_call.1} parent=5 // pred_check_branch
      %191 = sbr.rel (%p188) target = $region40
    $region39: #{tpu_custom_call.1} parent=5 // pred_region
      %s192 = ssub.s32 %s11, 1
      %p193 = scmp.lt.s32.totalorder %s16, 1
      %s194 = scalar_select %p193, %s16, 1
      %s195 = smul.addr %s194, 4
      %s196 = smul.addr %s195, 8
      %s197 = scalar_lea.vmem %s0, %s196
      %p198 = pneg %p37
      %p199 = pneg %p34
      %p200 = pneg %p58
      %p201 = pneg %p55
      %p202 = pneg %p79
      %p203 = pneg %p76
      %p204 = pneg %p100
      %p205 = pneg %p97
      %p206 = pneg %p121
      %p207 = pneg %p118
      %p208 = pneg %p147
      %p209 = pneg %p144
      %p210 = scmp.lt.s32.totalorder %s16, 1
      %s211 = scalar_select %p210, %s16, 1
      %s212 = smul.addr %s211, 4
      %s213 = smul.addr %s212, 8
      %s214 = scalar_lea.vmem %s5, %s213
      %p215 = scmp.lt.s32.totalorder %s16, 1
      %s216 = scalar_select %p215, %s16, 1
      %s217 = smul.addr %s216, 4
      %s218 = smul.addr %s217, 8
      %s219 = scalar_lea.vmem %s0, %s218
      %p220 = scmp.lt.s32.totalorder %s16, 1
      %s221 = scalar_select %p220, %s16, 1
      %s222 = smul.addr %s221, 4
      %s223 = smul.addr %s222, 8
      %s224 = scalar_lea.vmem %s5, %s223
      %v225 = vld [vmem:[%s219] sm:$0xff]
      %v226 = vld [vmem:[%s219 + $0x8] sm:$0xff]
      %v227 = vld [vmem:[%s219 + $0x10] sm:$0xff]
      %v228 = vld [vmem:[%s219 + $0x18] sm:$0xff]
      %vm229 = vcmask 130048
      %v230 = vsel %vm229, %v225, 0.0
      %231 = vadd.xlane.f32.xlu0 %v230
      %v232 = vpop.xlane.xlu0 %231
      %v233 = vsel %vm229, %v226, 0.0
      %234 = vadd.xlane.f32.xlu0 %v233
      %v235 = vpop.xlane.xlu0 %234
      %v236 = vsel %vm229, %v227, 0.0
      %237 = vadd.xlane.f32.xlu0 %v236
      %v238 = vpop.xlane.xlu0 %237
      %v239 = vsel %vm229, %v228, 0.0
      %240 = vadd.xlane.f32.xlu0 %v239
      %v241 = vpop.xlane.xlu0 %240
      %v242 = vmul.f32 %v232, 0.0625
      %v243 = vmul.f32 %v235, 0.0625
      %v244 = vmul.f32 %v238, 0.0625
      %v245 = vmul.f32 %v241, 0.0625
      %v246 = vld [vmem:[%s1] sm:$0xff]
      %v247 = vld [vmem:[%s1 + $0x8] sm:$0xff]
      %v248 = vld [vmem:[%s1 + $0x10] sm:$0xff]
      %v249 = vld [vmem:[%s1 + $0x18] sm:$0xff]
      %v250 = vld [vmem:[%s2] sm:$0x1]
      %v255 = vlaneseq
      %v256 = vand.u32 %v255, 127
      %v257 = vlaneseq
      %v258 = vshrl.u32 %v257, 7
      %v259 = vsub.s32 %v256, %v258
      %v260 = vrot.slane %v242, %v259
      %v261 = vadd.s32 %v256, 4294967288
      %v262 = vlaneseq
      %v263 = vshrl.u32 %v262, 7
      %v264 = vsub.s32 %v261, %v263
      %v265 = vrot.slane %v243, %v264
      %vm266 = vcmask 130112
      %v267 = vsel %vm266, %v265, %v260
      %v268 = vadd.s32 %v256, 4294967280
      %v269 = vlaneseq
      %v270 = vshrl.u32 %v269, 7
      %v271 = vsub.s32 %v268, %v270
      %v272 = vrot.slane %v244, %v271
      %vm273 = vcmask 195712
      %v274 = vsel %vm273, %v272, %v267
      %v275 = vadd.s32 %v256, 4294967272
      %v276 = vlaneseq
      %v277 = vshrl.u32 %v276, 7
      %v278 = vsub.s32 %v275, %v277
      %v279 = vrot.slane %v245, %v278
      %vm280 = vcmask 261312
      %v281 = vsel %vm280, %v279, %v274
      %vm282 = vcmask 261120
      %v283 = vsel %vm282, %v281, 0
      %285 = vmatprep.subr.mxu0 0.0
      %286 = vmatpush1.msra.mxu0 %v246
      %287 = vmatprep.subr.mxu0 0.0
      %288 = vmatpush1.msra.mxu0 %v247
      %289 = vmatprep.subr.mxu0 0.0
      %290 = vmatpush1.msra.mxu0 %v248
      %291 = vmatprep.subr.mxu0 0.0
      %292 = vmatpush1.msra.mxu0 %v249
      %293 = vmatprep.subr.mxu0 0.0
      %294 = vmatpush1.msra.mxu0 0.0
      %295 = vmatprep.subr.mxu0 0.0
      %296 = vmatpush1.msra.mxu0 0.0
      %297 = vmatprep.subr.mxu0 0.0
      %298 = vmatpush1.msra.mxu0 0.0
      %299 = vmatprep.subr.mxu0 0.0
      %300 = vmatpush1.msra.mxu0 0.0
      %301 = vmatprep.subr.mxu0 0.0
      %302 = vmatpush1.msra.mxu0 0.0
      %303 = vmatprep.subr.mxu0 0.0
      %304 = vmatpush1.msra.mxu0 0.0
      %305 = vmatprep.subr.mxu0 0.0
      %306 = vmatpush1.msra.mxu0 0.0
      %307 = vmatprep.subr.mxu0 0.0
      %308 = vmatpush1.msra.mxu0 0.0
      %309 = vmatprep.subr.mxu0 0.0
      %310 = vmatpush1.msra.mxu0 0.0
      %311 = vmatprep.subr.mxu0 0.0
      %312 = vmatpush1.msra.mxu0 0.0
      %313 = vmatprep.subr.mxu0 0.0
      %314 = vmatpush1.msra.mxu0 0.0
      %315 = vmatprep.subr.mxu0 0.0
      %316 = vmatpush1.msra.mxu0 0.0
      %317 = vmatprep.subr.mxu0 0.0
      %318 = vmatpush1.msra.mxu0 0.0
      %319 = vmatprep.subr.mxu0 0.0
      %320 = vmatpush1.msra.mxu0 0.0
      %321 = vmatprep.subr.mxu0 0.0
      %322 = vmatpush1.msra.mxu0 0.0
      %323 = vmatprep.subr.mxu0 0.0
      %324 = vmatpush1.msra.mxu0 0.0
      %325 = vmatprep.subr.mxu0 0.0
      %326 = vmatpush1.msra.mxu0 0.0
      %327 = vmatprep.subr.mxu0 0.0
      %328 = vmatpush1.msra.mxu0 0.0
      %329 = vmatprep.subr.mxu0 0.0
      %330 = vmatpush1.msra.mxu0 0.0
      %331 = vmatprep.subr.mxu0 0.0
      %332 = vmatpush1.msra.mxu0 0.0
      %333 = vmatprep.subr.mxu0 0.0
      %334 = vmatpush1.msra.mxu0 0.0
      %335 = vmatprep.subr.mxu0 0.0
      %336 = vmatpush1.msra.mxu0 0.0
      %337 = vmatprep.subr.mxu0 0.0
      %338 = vmatpush1.msra.mxu0 0.0
      %339 = vmatprep.subr.mxu0 0.0
      %340 = vmatpush1.msra.mxu0 0.0
      %341 = vmatprep.subr.mxu0 0.0
      %342 = vmatpush1.msra.mxu0 0.0
      %343 = vmatprep.subr.mxu0 0.0
      %344 = vmatpush1.msra.mxu0 0.0
      %345 = vmatprep.subr.mxu0 0.0
      %346 = vmatpush1.msra.mxu0 0.0
      %347 = vmatprep.subr.mxu0 0.0
      %348 = vmatpush1.msra.mxu0 0.0
      %349 = vmatprep.mubr.f32.mxu0 0.0
      %350 = vmatmul.mubr.f32.gmra.mrb[0].mxu0 %v283
      %v351 = vpop.f32.mrb[0].mxu0
      %v352 = vadd.f32 %v250, %v351
      %v353 = vpop.f32.mrb[0].mxu0
      %354 = vdwg.mxu0
      %v355 = vmax.f32 %v352, 0.0
      %v356 = vld [vmem:[%s3] sm:$0xf]
      %v357 = vld [vmem:[%s4] sm:$0x1]
      %vm358 = vcmask 31744
      %v360 = vsel %vm358, %v355, 0
      %vm362 = vcmask 1043456
      %v364 = vsel %vm362, %v356, 0
      %366 = vmatprep.subr.mxu0 0.0
      %367 = vmatpush1.msra.mxu0 %v364
      %368 = vmatprep.subr.mxu0 0.0
      %369 = vmatpush1.msra.mxu0 0.0
      %370 = vmatprep.subr.mxu0 0.0
      %371 = vmatpush1.msra.mxu0 0.0
      %372 = vmatprep.subr.mxu0 0.0
      %373 = vmatpush1.msra.mxu0 0.0
      %374 = vmatprep.subr.mxu0 0.0
      %375 = vmatpush1.msra.mxu0 0.0
      %376 = vmatprep.subr.mxu0 0.0
      %377 = vmatpush1.msra.mxu0 0.0
      %378 = vmatprep.subr.mxu0 0.0
      %379 = vmatpush1.msra.mxu0 0.0
      %380 = vmatprep.subr.mxu0 0.0
      %381 = vmatpush1.msra.mxu0 0.0
      %382 = vmatprep.subr.mxu0 0.0
      %383 = vmatpush1.msra.mxu0 0.0
      %384 = vmatprep.subr.mxu0 0.0
      %385 = vmatpush1.msra.mxu0 0.0
      %386 = vmatprep.subr.mxu0 0.0
      %387 = vmatpush1.msra.mxu0 0.0
      %388 = vmatprep.subr.mxu0 0.0
      %389 = vmatpush1.msra.mxu0 0.0
      %390 = vmatprep.subr.mxu0 0.0
      %391 = vmatpush1.msra.mxu0 0.0
      %392 = vmatprep.subr.mxu0 0.0
      %393 = vmatpush1.msra.mxu0 0.0
      %394 = vmatprep.subr.mxu0 0.0
      %395 = vmatpush1.msra.mxu0 0.0
      %396 = vmatprep.subr.mxu0 0.0
      %397 = vmatpush1.msra.mxu0 0.0
      %398 = vmatprep.subr.mxu0 0.0
      %399 = vmatpush1.msra.mxu0 0.0
      %400 = vmatprep.subr.mxu0 0.0
      %401 = vmatpush1.msra.mxu0 0.0
      %402 = vmatprep.subr.mxu0 0.0
      %403 = vmatpush1.msra.mxu0 0.0
      %404 = vmatprep.subr.mxu0 0.0
      %405 = vmatpush1.msra.mxu0 0.0
      %406 = vmatprep.subr.mxu0 0.0
      %407 = vmatpush1.msra.mxu0 0.0
      %408 = vmatprep.subr.mxu0 0.0
      %409 = vmatpush1.msra.mxu0 0.0
      %410 = vmatprep.subr.mxu0 0.0
      %411 = vmatpush1.msra.mxu0 0.0
      %412 = vmatprep.subr.mxu0 0.0
      %413 = vmatpush1.msra.mxu0 0.0
      %414 = vmatprep.subr.mxu0 0.0
      %415 = vmatpush1.msra.mxu0 0.0
      %416 = vmatprep.subr.mxu0 0.0
      %417 = vmatpush1.msra.mxu0 0.0
      %418 = vmatprep.subr.mxu0 0.0
      %419 = vmatpush1.msra.mxu0 0.0
      %420 = vmatprep.subr.mxu0 0.0
      %421 = vmatpush1.msra.mxu0 0.0
      %422 = vmatprep.subr.mxu0 0.0
      %423 = vmatpush1.msra.mxu0 0.0
      %424 = vmatprep.subr.mxu0 0.0
      %425 = vmatpush1.msra.mxu0 0.0
      %426 = vmatprep.subr.mxu0 0.0
      %427 = vmatpush1.msra.mxu0 0.0
      %428 = vmatprep.subr.mxu0 0.0
      %429 = vmatpush1.msra.mxu0 0.0
      %430 = vmatprep.mubr.f32.mxu0 0.0
      %431 = vmatmul.mubr.f32.gmra.mrb[0].mxu0 %v360
      %v432 = vpop.f32.mrb[0].mxu0
      %v433 = vadd.f32 %v357, %v432
      %v434 = vpop.f32.mrb[0].mxu0
      %435 = vdwg.mxu0
      %v436 = vxor.u32 %v433, 2147483648
      %v437 = vmul.f32 %v436, 1.442695
      %v438 = vpow.pop %v437
      %v439 = vadd.f32 %v438, 1.0
      %v440 = vrcp.pop %v439
      %v441 = vmul.f32 1.0, %v440
      %v442 = vlaneseq
      %v443 = vshrl.u32 %v442, 7
      %v444 = vsub.s32 0, %v443
      %v445 = vrot.slane %v441, %v444
      %447 = vbcast.lane.b32.xlu0 %v445, 256
      %v448 = vpop.permute.xlu0 %447
      %s450 = sor.u32 256, 8
      %451 = vbcast.lane.b32.xlu0 %v445, %s450
      %v452 = vpop.permute.xlu0 %451
      %s454 = sor.u32 256, 16
      %455 = vbcast.lane.b32.xlu0 %v445, %s454
      %v456 = vpop.permute.xlu0 %455
      %s458 = sor.u32 256, 24
      %459 = vbcast.lane.b32.xlu0 %v445, %s458
      %v460 = vpop.permute.xlu0 %459
      %v461 = vmul.f32 %v225, %v448
      %v462 = vmul.f32 %v226, %v452
      %v463 = vmul.f32 %v227, %v456
      %v464 = vmul.f32 %v228, %v460
      %465 = vst.msk [vmem:[%s224] sm:$0xff] %vm229, %v461
      %466 = vst.msk [vmem:[%s224 + $0x8] sm:$0xff] %vm229, %v462
      %467 = vst.msk [vmem:[%s224 + $0x10] sm:$0xff] %vm229, %v463
      %468 = vst.msk [vmem:[%s224 + $0x18] sm:$0xff] %vm229, %v464
      %p469 = scmp.lt.s32.totalorder %s16, 1
      %s470 = scalar_select %p469, %s16, 1
      %s471 = smul.addr %s470, 4
      %s472 = smul.addr %s471, 8
      %s473 = scalar_lea.vmem %s5, %s472
      // Predicated region
      $region41: #{tpu_custom_call.1} parent=39 // pred_check
        %p474 = pneg %p144
      $region42: #{tpu_custom_call.1} parent=39 // pred_check_branch
        %476 = sbr.rel (%p474) target = $region44
      $region43: #{tpu_custom_call.1} parent=39 // pred_region
        _
      $region44: #{tpu_custom_call.1} parent=39 // pred_fallthru
        _
    $region40: #{tpu_custom_call.1} parent=5 // pred_fallthru
      _
    %p477 = scmp.le.s32.totalorder 2, %s11
    // Predicated region
    $region45: #{tpu_custom_call.1} parent=5 // pred_check
      %p478 = pneg %p477
    $region46: #{tpu_custom_call.1} parent=5 // pred_check_branch
      %480 = sbr.rel (%p478) target = $region48
    $region47: #{tpu_custom_call.1} parent=5 // pred_region
      %s481 = ssub.s32 %s11, 2
      // Predicated region
      $region49: #{tpu_custom_call.1} parent=47 // pred_check
        %p482 = pneg %p150
      $region50: #{tpu_custom_call.1} parent=47 // pred_check_branch
        %484 = sbr.rel (%p482) target = $region52
      $region51: #{tpu_custom_call.1} parent=47 // pred_region
        %p485 = scmp.lt.s32.totalorder %s17, 1
        %s486 = scalar_select %p485, %s17, 1
        %s487 = smul.addr %s486, 4
        %s488 = smul.addr %s487, 8
        %s489 = scalar_lea.vmem %s5, %s488
      $region52: #{tpu_custom_call.1} parent=47 // pred_fallthru
        _
    $region48: #{tpu_custom_call.1} parent=5 // pred_fallthru
      _
  $region6: #{tpu_custom_call.1} parent=0 // loop_footer
    %s15 = sadd.s32 1, %s11
  $region7: #{tpu_custom_call.1} parent=0 // loop_footer_branch
    %10 = sbr.rel target = $region3
  $region8: #{tpu_custom_call.1} parent=0 // loop_exit
    _

</llo_original>
